<compile_context>
chip_gen: v7x
topology: tpu7x:2x2x1
jax: 0.10.0
libtpu: 0.0.40
codegen_flags: <defaults>
</compile_context>

<pallas_src>
import math

import jax
import jax.numpy as jnp
from jax.experimental import pallas as pl
from jax.experimental.pallas import tpu as pltpu


def filter_kernel(x_ref, w1f_ref, b1_ref, w2_ref, b2_ref, emb_ref, prob_ref, acc_ref):
    k = pl.program_id(1)

    x = x_ref[...]                                        # (1, TS, L), input dtype

    # keep_mapping = ReLU(x): lane-dense elementwise stream (dominant HBM traffic).
    emb_ref[...] = jnp.maximum(x, 0).astype(emb_ref.dtype)

    # Router: running sum over the (folded) sequence axis, carried across the k axis.
    @pl.when(k == 0)
    def _init():
        acc_ref[...] = jnp.zeros_like(acc_ref)

    # NOTE(perf): this cross-sublane reduce sits on the XLU; the kernel is HBM-bound
    # so it is free filler today (see review) - do not restructure unless a bundle
    # dump shows the XLU slot binding after megacore sharding.
    acc_ref[...] += jnp.sum(x.astype(jnp.float32), axis=1)           # (1, L)

    @pl.when(k == pl.num_programs(1) - 1)
    def _finalize():
        # W1 was pre-scaled by 1/S and tiled over the F lane groups to (L, H) in the
        # wrapper, so un-folding the lane groups is a single clean matmul - no
        # unaligned lane slicing / vreg relayout in the epilogue.
        h = jnp.dot(acc_ref[...], w1f_ref[...],
                    preferred_element_type=jnp.float32) + b1_ref[...]       # (1, H)
        h = jnp.maximum(h, 0.0)
        logits = jnp.dot(h, w2_ref[...],
                         preferred_element_type=jnp.float32) + b2_ref[...]  # (1, P)
        # Sigmoid via the stable tanh formulation -> EUP slot, no overflow.
        sig = 0.5 * (jnp.tanh(0.5 * logits) + 1.0)
        prob_ref[...] = sig[None].astype(prob_ref.dtype)                    # (1, 1, P)


def _fold_factor(S, E):
    """Fold consecutive sequence positions onto the lane axis so the last dim is a
    multiple of 128 (unmasked vst on the emb stream). L = lcm(E, 128), F = L // E."""
    L = math.lcm(E, 128)
    F = L // E
    if F > 1 and S % F == 0:
        return F
    # TODO(synk): for S not divisible by F, a partial fold (largest F | S) would still
    # reduce masking waste; fall back to the unfolded layout for now.
    return 1


def _sublane_multiple(dtype):
    """Native sublane tile rows: 8 for f32, 16 for bf16/f16, 32 for int8/fp8."""
    return max(8, 32 // jnp.dtype(dtype).itemsize)


def _pick_seq_tile(s_folded, row_bytes, sub, target_bytes):
    """Largest tile of folded-seq rows that divides s_folded exactly (no tail tile,
    no padded garbage in the sum accumulator), is a multiple of the native sublane
    tile (or the whole axis), and keeps one x tile around `target_bytes`."""
    if s_folded <= sub:
        return s_folded
    max_rows = max(sub, target_bytes // max(row_bytes, 1))
    best = None
    t = sub
    while t <= min(s_folded, max_rows):
        if s_folded % t == 0:
            best = t
        t += sub
    if best is not None:
        return best
    # No sublane-aligned divisor under the target: take the smallest one above it.
    t = (max_rows // sub + 1) * sub
    while t <= s_folded:
        if s_folded % t == 0:
            return t
        t += sub
    return s_folded


def filter_forward(x, w1, b1, w2, b2, *, seq_tile=None, target_tile_bytes=6 << 20):
    B, S, E = x.shape
    H = w1.shape[1]
    P = w2.shape[1]
    itemsize = jnp.dtype(x.dtype).itemsize

    # Lane-dense layout plumbing (relu is elementwise; the reshape is exactly invertible).
    F = _fold_factor(S, E)
    Sf = S // F
    L = F * E
    xr = x.reshape(B, Sf, L)

    sub = _sublane_multiple(x.dtype)
    if seq_tile is None:
        seq_tile = _pick_seq_tile(Sf, L * itemsize, sub, target_tile_bytes)
    assert Sf % seq_tile == 0, "seq_tile must divide the folded sequence length"
    assert seq_tile == Sf or seq_tile % sub == 0, \
        f"seq_tile must be a multiple of {sub} sublane rows for dtype {x.dtype}"
    n_steps = Sf // seq_tile

    # Fold the 1/S of the router mean into W1 and tile it over the F lane groups:
    # acc(1,L) @ w1f(L,H) == (sum_S x) @ (W1 / S)  with zero in-kernel lane shuffling.
    w1f = (jnp.concatenate([w1.astype(jnp.float32)] * F, axis=0) * (1.0 / S)).astype(w1.dtype)

    param_bytes = int((w1f.size + b1.size + w2.size + b2.size) * 4)

    # Advisory cost hint: clearly mem-bound on the relu(x) stream.
    cost = pl.CostEstimate(
        flops=int(2 * B * S * E + 2 * B * L * H + 2 * B * H * P),
        transcendentals=int(B * P),
        bytes_accessed=int(2 * B * S * E * itemsize + param_bytes + B * P * itemsize),
    )

    # VMEM budget from the actual tile: double-buffered x-in + emb-out tiles, weights,
    # scratch and headroom.  Cap generation-aware (v7x has only 64 MiB per TC).
    tile_bytes = seq_tile * L * itemsize
    needed = 5 * tile_bytes + param_bytes + (4 << 20)
    try:
        phys_vmem = int(pltpu.get_tpu_info().vmem_capacity_bytes)
    except Exception:
        phys_vmem = 64 << 20                      # smallest current generation (v7x per-TC)
    cap = (phys_vmem * 3) // 4                    # leave headroom for compiler scratch
    if needed > cap:
        raise ValueError(
            f"seq_tile={seq_tile} needs ~{needed >> 20} MiB VMEM but the cap is "
            f"{cap >> 20} MiB on this chip; pass a smaller seq_tile/target_tile_bytes")
    vmem_limit = max(needed, 16 << 20)

    # TODO(synk): for B == 1 on v7x, split the sequence axis into an outer parallel
    # axis of size 2 with per-core partial sums combined in the wrapper.
    emb_r, prob3 = pl.pallas_call(
        filter_kernel,
        out_shape=(
            jax.ShapeDtypeStruct((B, Sf, L), x.dtype),    # emb (folded, lane-dense layout)
            jax.ShapeDtypeStruct((B, 1, P), x.dtype),     # path_prob (squeezed in wrapper)
        ),
        grid_spec=pltpu.PrefetchScalarGridSpec(
            num_scalar_prefetch=0,
            grid=(B, n_steps),
            in_specs=[
                pl.BlockSpec((1, seq_tile, L), lambda b, k: (b, k, 0)),   # x: contiguous slab/step
                pl.BlockSpec((L, H), lambda b, k: (0, 0)),                # W1 tiled+scaled (resident)
                pl.BlockSpec((1, H), lambda b, k: (0, 0)),                # b1
                pl.BlockSpec((H, P), lambda b, k: (0, 0)),                # W2
                pl.BlockSpec((1, P), lambda b, k: (0, 0)),                # b2
            ],
            out_specs=(
                pl.BlockSpec((1, seq_tile, L), lambda b, k: (b, k, 0)),   # emb tile
                pl.BlockSpec((1, 1, P), lambda b, k: (b, 0, 0)),          # prob (written at last k)
            ),
            scratch_shapes=[pltpu.VMEM((1, L), jnp.float32)],             # carried seq-sum (per b)
        ),
        compiler_params=pltpu.CompilerParams(
            # B is independent -> "parallel" (v7x megacore); k carries the router sum
            # accumulator -> "arbitrary".
            dimension_semantics=("parallel", "arbitrary"),
            vmem_limit_bytes=int(vmem_limit),
        ),
        cost_estimate=cost,
    )(xr, w1f, b1, w2, b2)

    return emb_r.reshape(B, S, E), prob3.reshape(B, P)


def filter_reference(x, w1, b1, w2, b2):
    emb = jnp.maximum(x, 0.0)
    xm = jnp.mean(x, axis=1)
    h = jnp.maximum(xm @ w1 + b1, 0.0)
    prob = jax.nn.sigmoid(h @ w2 + b2)
    return emb, prob


if __name__ == "__main__":
    def make_inputs(key, B, S, E, H, P):
        kx, kw1, kb1, kw2 = jax.random.split(key, 4)
        x = jax.random.normal(kx, (B, S, E), dtype=jnp.float32)
        w1 = jax.random.normal(kw1, (E, H), dtype=jnp.float32) * 0.1
        b1 = jax.random.normal(kb1, (1, H), dtype=jnp.float32) * 0.1
        w2 = jax.random.normal(kw2, (H, P), dtype=jnp.float32) * 0.1
        b2 = jnp.full((1, P), 1.5, dtype=jnp.float32)  # Router.init_weights(): bias.fill_(1.5)
        return x, w1, b1, w2, b2

    k1, k2, k3, k4 = jax.random.split(jax.random.PRNGKey(0), 4)

    def check(args, **kw):
        emb, prob = filter_forward(*args, **kw)
        jax.block_until_ready((emb, prob))
        emb_ref, prob_ref = filter_reference(*args)
        assert jnp.allclose(emb, emb_ref, atol=1e-5, rtol=1e-5)
        assert jnp.allclose(prob, prob_ref, atol=1e-5, rtol=1e-5)

    # 1) Module-sized config: embed_size=32, hid_router=16, num_out_path=4.
    #    F = 4 -> L = 128, Sf = 2, single grid step per batch row.
    check(make_inputs(k1, B=2, S=8, E=32, H=16, P=4))

    # 2) Longer sequence with an explicit tile: folded seq = 64 -> 8 grid steps per b;
    #    exercises the carried sum accumulator, per-b finalize, and megacore-able B axis.
    check(make_inputs(k2, B=2, S=256, E=32, H=16, P=4), seq_tile=8)

    # 3) Embed size that needs the lcm fold: E=48 -> L=384, F=8, Sf=1 (lane-dense stores).
    check(make_inputs(k3, B=2, S=8, E=48, H=16, P=4))

    # 4) S not divisible by the lane-fold factor -> F=1 fallback path.
    check(make_inputs(k4, B=2, S=6, E=32, H=16, P=4))

    print("KERNEL_OK")
</pallas_src>

<mosaic_0001>
module attributes {stable_mosaic.version = 11 : i64} {
  func.func @filter_kernel(%arg0: i32, %arg1: i32, %arg2: memref<1x2x128xf32, #tpu.memory_space<vmem>>, %arg3: memref<128x16xf32, #tpu.memory_space<vmem>>, %arg4: memref<1x16xf32, #tpu.memory_space<vmem>>, %arg5: memref<16x4xf32, #tpu.memory_space<vmem>>, %arg6: memref<1x4xf32, #tpu.memory_space<vmem>>, %arg7: memref<1x2x128xf32, #tpu.memory_space<vmem>>, %arg8: memref<1x1x4xf32, #tpu.memory_space<vmem>>, %arg9: memref<1x128xf32, #tpu.memory_space<vmem>>) attributes {dimension_semantics = [#tpu.dimension_semantics<parallel>, #tpu.dimension_semantics<arbitrary>], iteration_bounds = array<i64: 2, 1>, scalar_prefetch = 0 : i64, scratch_operands = 1 : i64, tpu.core_type = #tpu.core_type<tc>, window_params = [{transform_indices = @transform_0, window_bounds = array<i64: 1, 2, 128>}, {pipeline_mode = #tpu.pipeline_mode<synchronous>, transform_indices = @transform_1, window_bounds = array<i64: 128, 16>}, {pipeline_mode = #tpu.pipeline_mode<synchronous>, transform_indices = @transform_2, window_bounds = array<i64: 1, 16>}, {pipeline_mode = #tpu.pipeline_mode<synchronous>, transform_indices = @transform_3, window_bounds = array<i64: 16, 4>}, {pipeline_mode = #tpu.pipeline_mode<synchronous>, transform_indices = @transform_4, window_bounds = array<i64: 1, 4>}, {transform_indices = @transform_5, window_bounds = array<i64: 1, 2, 128>}, {transform_indices = @transform_6, window_bounds = array<i64: 1, 1, 4>}]} {
    %c0 = arith.constant 0 : index
    %c0_0 = arith.constant 0 : index
    %c0_1 = arith.constant 0 : index
    %0 = vector.load %arg2[%c0, %c0_0, %c0_1] : memref<1x2x128xf32, #tpu.memory_space<vmem>>, vector<1x2x128xf32>
    %cst = arith.constant 0.000000e+00 : f32
    %1 = vector.broadcast %cst : f32 to vector<1x2x128xf32>
    %2 = arith.maximumf %0, %1 : vector<1x2x128xf32>
    %c0_2 = arith.constant 0 : index
    %c0_3 = arith.constant 0 : index
    %c0_4 = arith.constant 0 : index
    %3 = vector.load %arg7[%c0_2, %c0_3, %c0_4] : memref<1x2x128xf32, #tpu.memory_space<vmem>>, vector<1x2x128xf32>
    tpu.vector_store %arg7[%c0_2, %c0_3, %c0_4], %2 {strides = array<i32>} : memref<1x2x128xf32, #tpu.memory_space<vmem>>, vector<1x2x128xf32>,
    %c0_i32 = arith.constant 0 : i32
    %4 = arith.cmpi eq, %arg1, %c0_i32 : i32
    %5 = arith.extui %4 : i1 to i32
    %c0_i32_5 = arith.constant 0 : i32
    %6 = arith.cmpi ne, %5, %c0_i32_5 : i32
    scf.if %6 {
      %cst_13 = arith.constant 0.000000e+00 : f32
      %14 = vector.broadcast %cst_13 : f32 to vector<1x128xf32>
      %c0_14 = arith.constant 0 : index
      %c0_15 = arith.constant 0 : index
      %15 = vector.load %arg9[%c0_14, %c0_15] : memref<1x128xf32, #tpu.memory_space<vmem>>, vector<1x128xf32>
      tpu.vector_store %arg9[%c0_14, %c0_15], %14 {strides = array<i32>} : memref<1x128xf32, #tpu.memory_space<vmem>>, vector<1x128xf32>,
    } else {
    }
    %c0_6 = arith.constant 0 : index
    %c0_7 = arith.constant 0 : index
    %7 = vector.load %arg9[%c0_6, %c0_7] : memref<1x128xf32, #tpu.memory_space<vmem>>, vector<1x128xf32>
    %cst_8 = arith.constant dense<0.000000e+00> : vector<1x128xf32>
    %8 = vector.multi_reduction <add>, %0, %cst_8 [1] : vector<1x2x128xf32> to vector<1x128xf32>
    %9 = arith.addf %7, %8 : vector<1x128xf32>
    %c0_9 = arith.constant 0 : index
    %c0_10 = arith.constant 0 : index
    %10 = vector.load %arg9[%c0_9, %c0_10] : memref<1x128xf32, #tpu.memory_space<vmem>>, vector<1x128xf32>
    tpu.vector_store %arg9[%c0_9, %c0_10], %9 {strides = array<i32>} : memref<1x128xf32, #tpu.memory_space<vmem>>, vector<1x128xf32>,
    %c0_i32_11 = arith.constant 0 : i32
    %11 = arith.cmpi eq, %arg1, %c0_i32_11 : i32
    %12 = arith.extui %11 : i1 to i32
    %c0_i32_12 = arith.constant 0 : i32
    %13 = arith.cmpi ne, %12, %c0_i32_12 : i32
    scf.if %13 {
      %c0_13 = arith.constant 0 : index
      %c0_14 = arith.constant 0 : index
      %14 = vector.load %arg9[%c0_13, %c0_14] : memref<1x128xf32, #tpu.memory_space<vmem>>, vector<1x128xf32>
      %c0_15 = arith.constant 0 : index
      %c0_16 = arith.constant 0 : index
      %15 = vector.load %arg3[%c0_15, %c0_16] : memref<128x16xf32, #tpu.memory_space<vmem>>, vector<128x16xf32>
      %cst_17 = arith.constant dense<0.000000e+00> : vector<1x16xf32>
      %16 = tpu.matmul %14, %15, %cst_17 {dimension_numbers = #tpu.dot_dimension_numbers<[1], [0], [0], [1], [0, 0, 1, 1], [], []>} : vector<1x128xf32>, vector<128x16xf32>, vector<1x16xf32> -> vector<1x16xf32>
      %c0_18 = arith.constant 0 : index
      %c0_19 = arith.constant 0 : index
      %17 = vector.load %arg4[%c0_18, %c0_19] : memref<1x16xf32, #tpu.memory_space<vmem>>, vector<1x16xf32>
      %18 = arith.addf %16, %17 : vector<1x16xf32>
      %cst_20 = arith.constant 0.000000e+00 : f32
      %19 = vector.broadcast %cst_20 : f32 to vector<1x16xf32>
      %20 = arith.maximumf %18, %19 : vector<1x16xf32>
      %c0_21 = arith.constant 0 : index
      %c0_22 = arith.constant 0 : index
      %21 = vector.load %arg5[%c0_21, %c0_22] : memref<16x4xf32, #tpu.memory_space<vmem>>, vector<16x4xf32>
      %cst_23 = arith.constant dense<0.000000e+00> : vector<1x4xf32>
      %22 = tpu.matmul %20, %21, %cst_23 {dimension_numbers = #tpu.dot_dimension_numbers<[1], [0], [0], [1], [0, 0, 1, 1], [], []>} : vector<1x16xf32>, vector<16x4xf32>, vector<1x4xf32> -> vector<1x4xf32>
      %c0_24 = arith.constant 0 : index
      %c0_25 = arith.constant 0 : index
      %23 = vector.load %arg6[%c0_24, %c0_25] : memref<1x4xf32, #tpu.memory_space<vmem>>, vector<1x4xf32>
      %24 = arith.addf %22, %23 : vector<1x4xf32>
      %cst_26 = arith.constant 5.000000e-01 : f32
      %25 = vector.broadcast %cst_26 : f32 to vector<1x4xf32>
      %26 = arith.mulf %25, %24 : vector<1x4xf32>
      %27 = math.tanh %26 : vector<1x4xf32>
      %cst_27 = arith.constant 1.000000e+00 : f32
      %28 = vector.broadcast %cst_27 : f32 to vector<1x4xf32>
      %29 = arith.addf %27, %28 : vector<1x4xf32>
      %cst_28 = arith.constant 5.000000e-01 : f32
      %30 = vector.broadcast %cst_28 : f32 to vector<1x4xf32>
      %31 = arith.mulf %30, %29 : vector<1x4xf32>
      %32 = vector.shape_cast %31 : vector<1x4xf32> to vector<1x1x4xf32>
      %c0_29 = arith.constant 0 : index
      %c0_30 = arith.constant 0 : index
      %c0_31 = arith.constant 0 : index
      %33 = vector.load %arg8[%c0_29, %c0_30, %c0_31] : memref<1x1x4xf32, #tpu.memory_space<vmem>>, vector<1x1x4xf32>
      tpu.vector_store %arg8[%c0_29, %c0_30, %c0_31], %32 {strides = array<i32>} : memref<1x1x4xf32, #tpu.memory_space<vmem>>, vector<1x1x4xf32>,
    } else {
    }
    return
  }
  func.func @transform_0(%arg0: i32, %arg1: i32) -> (i32, i32, i32) {
    %c0_i32 = arith.constant 0 : i32
    %c0_i32_0 = arith.constant 0 : i32
    return %arg0, %arg1, %c0_i32 : i32, i32, i32
  }
  func.func @transform_1(%arg0: i32, %arg1: i32) -> (i32, i32) {
    %c0_i32 = arith.constant 0 : i32
    %c0_i32_0 = arith.constant 0 : i32
    %c0_i32_1 = arith.constant 0 : i32
    return %c0_i32, %c0_i32_0 : i32, i32
  }
  func.func @transform_2(%arg0: i32, %arg1: i32) -> (i32, i32) {
    %c0_i32 = arith.constant 0 : i32
    %c0_i32_0 = arith.constant 0 : i32
    %c0_i32_1 = arith.constant 0 : i32
    return %c0_i32, %c0_i32_0 : i32, i32
  }
  func.func @transform_3(%arg0: i32, %arg1: i32) -> (i32, i32) {
    %c0_i32 = arith.constant 0 : i32
    %c0_i32_0 = arith.constant 0 : i32
    %c0_i32_1 = arith.constant 0 : i32
    return %c0_i32, %c0_i32_0 : i32, i32
  }
  func.func @transform_4(%arg0: i32, %arg1: i32) -> (i32, i32) {
    %c0_i32 = arith.constant 0 : i32
    %c0_i32_0 = arith.constant 0 : i32
    %c0_i32_1 = arith.constant 0 : i32
    return %c0_i32, %c0_i32_0 : i32, i32
  }
  func.func @transform_5(%arg0: i32, %arg1: i32) -> (i32, i32, i32) {
    %c0_i32 = arith.constant 0 : i32
    %c0_i32_0 = arith.constant 0 : i32
    return %arg0, %arg1, %c0_i32 : i32, i32, i32
  }
  func.func @transform_6(%arg0: i32, %arg1: i32) -> (i32, i32, i32) {
    %c0_i32 = arith.constant 0 : i32
    %c0_i32_0 = arith.constant 0 : i32
    %c0_i32_1 = arith.constant 0 : i32
    return %arg0, %c0_i32, %c0_i32_0 : i32, i32, i32
  }
}

</mosaic_0001>

<llo_original>
// kernel: tpu_custom_call.1
$region0: #{tpu_custom_call.1}
  #allocation0 [shape = 'u32[]', space=smem, size = 0x4, offset = 0x4, fixed_abs, tag = 'smem constant byte address 0x4 - core index']
  #allocation1 [shape = 'u32[144,128]{1,0:T(1,128)}', space=vmem, size = 0x12000, scoped, tag = 'internal scratch']
  #allocation2 [shape = 'f32[1,128]{1,0:T(1,128)}', space=vmem, size = 0x200, scoped, tag = 'scratch operand']
  %s0 = inlined_call_operand.vmem [shape: f32[2,2,128], index: 0, kind: input, shape index: {}]
  %s1 = inlined_call_operand.vmem [shape: f32[128,16], index: 1, kind: input, shape index: {}]
  %s2 = inlined_call_operand.vmem [shape: f32[1,16], index: 2, kind: input, shape index: {}]
  %s3 = inlined_call_operand.vmem [shape: f32[16,4], index: 3, kind: input, shape index: {}]
  %s4 = inlined_call_operand.vmem [shape: f32[1,4], index: 4, kind: input, shape index: {}]
  %s5 = inlined_call_operand.hbm [shape: f32[2,2,128], index: 5, kind: output, shape index: {0}]
  %s6 = inlined_call_operand.hbm [shape: f32[2,1,4], index: 6, kind: output, shape index: {1}]
  %7 = xla_tuple %s5, %s6
  %s8 = sld [smem:[#allocation0]]
  $region69: #{tpu_custom_call.1} parent=0
    _
  %s10 = ssub.s32 1, %s8
  %s11 = scalar_select 0, %s10, %s8
  $region1: #{tpu_custom_call.1} parent=0
    #allocation3 [shape = 'u8[2048]{0}', space=vmem, size = 0x800, scoped, tag = 'output window, operand 0']
    #allocation4 [shape = 's32[2]{0}', space=sflag, size = 0x8, scoped, tag = 'scoped memory for tpu_custom_call.1']
    #allocation5 [shape = 'u8[1024]{0}', space=vmem, size = 0x400, scoped, tag = 'output window, operand 1']
    #allocation6 [shape = 's32[2]{0}', space=sflag, size = 0x8, scoped, tag = 'scoped memory for tpu_custom_call.1']
    %12 = vsyncpa [#allocation4], 0
    %s13 = scalar_lea.sflag [#allocation4], 1
    %14 = vsyncpa %s13, 0
    %15 = vsyncpa [#allocation6], 0
    %s16 = scalar_lea.sflag [#allocation6], 1
    %17 = vsyncpa %s16, 0
    loop: start=0, step=1, limit=4
    $region2: #{tpu_custom_call.1} parent=1 // loop_pre_header
      _
    $region3: #{tpu_custom_call.1} parent=1 // loop_header
      %s19 = sphi 0, %s23
      %p20 = scmp.ge.s32.totalorder %s19, 4
      %s26 = sphi 0, %s38
      %s27 = sphi 0, %s34
      %s28 = sphi 0, %s26
      %s29 = sphi 0, %s27
      %s30 = sphi 0, %s28
      %s31 = sphi 0, %s29
      %s43 = sphi 0, %s45
      %s46 = sphi 0, %s43
      %s47 = sphi 0, %s46
      %s63 = sphi 0, %s47
      %s67 = sphi 0, %s67
      %s69 = sphi 0, %s67
      %s70 = sphi 0, %s69
      %s84 = sphi 0, %s70
      %s88 = sphi 0, %s88
      %s90 = sphi 0, %s88
      %s91 = sphi 0, %s90
      %s105 = sphi 0, %s91
      %s109 = sphi 0, %s109
      %s111 = sphi 0, %s109
      %s112 = sphi 0, %s111
      %s126 = sphi 0, %s112
      %s130 = sphi 0, %s130
      %s132 = sphi 0, %s130
      %s133 = sphi 0, %s132
      %s147 = sphi 0, %s133
      %s155 = sphi 0, %s157
      %s158 = sphi 0, %s155
      %s159 = sphi 0, %s158
      %s175 = sphi 0, %s159
      %s181 = sphi 0, %s183
      %s184 = sphi 0, %s181
      %s185 = sphi 0, %s184
      %s201 = sphi 0, %s185
    $region4: #{tpu_custom_call.1} parent=1 // loop_header_branch
      %22 = sbr.rel (%p20) target = $region8
    $region5: #{tpu_custom_call.1} parent=1 // loop_body
      %s24 = ssub.s32 %s19, 1
      %s25 = ssub.s32 %s19, 2
      %s32 = sadd.s32 1, %s27
      %p33 = scmp.ge.s32.totalorder %s32, 1
      %s34 = scalar_select %p33, 0, %s32
      %s35 = sadd.s32 1, %s26
      %s36 = scalar_select %p33, %s35, %s26
      %p37 = scmp.ge.s32.totalorder %s36, 2
      %s38 = scalar_select %p37, 0, %s36
      %s39 = ssub.s32 %s26, %s38
      %s40 = ssub.s32 %s27, %s34
      %s41 = sor.u32 %s39, %s40
      %p42 = scmp.eq.s32.totalorder %s41, 0
      %s44 = sadd.s32 %s43, 1
      %s45 = scalar_select %p42, %s43, %s44
      %p48 = pneg %p42
      %p49 = scmp.eq.s32.totalorder %s19, 1
      %p50 = por %p48, %p49
      %p51 = scmp.ne.s32.totalorder %s43, %s46
      %p52 = scmp.eq.s32.totalorder %s19, 0
      %p53 = por %p51, %p52
      %p54 = scmp.ne.s32.totalorder %s43, %s46
      %p55 = scmp.eq.s32.totalorder %s24, 1
      %p56 = por %p54, %p55
      %p57 = scmp.ne.s32.totalorder %s46, %s47
      %p58 = scmp.eq.s32.totalorder %s24, 0
      %p59 = por %p57, %p58
      %p60 = scmp.ne.s32.totalorder %s46, %s47
      %p61 = scmp.eq.s32.totalorder %s25, 1
      %p62 = por %p60, %p61
      %p64 = scmp.ne.s32.totalorder %s47, %s63
      %p65 = scmp.eq.s32.totalorder %s25, 0
      %p66 = por %p64, %p65
      %s68 = sadd.s32 %s67, 1
      %p71 = scmp.eq.s32.totalorder %s19, 1
      %p72 = scmp.ne.s32.totalorder %s67, %s69
      %p73 = scmp.eq.s32.totalorder %s19, 0
      %p74 = por %p72, %p73
      %p75 = scmp.ne.s32.totalorder %s67, %s69
      %p76 = scmp.eq.s32.totalorder %s24, 1
      %p77 = por %p75, %p76
      %p78 = scmp.ne.s32.totalorder %s69, %s70
      %p79 = scmp.eq.s32.totalorder %s24, 0
      %p80 = por %p78, %p79
      %p81 = scmp.ne.s32.totalorder %s69, %s70
      %p82 = scmp.eq.s32.totalorder %s25, 1
      %p83 = por %p81, %p82
      %p85 = scmp.ne.s32.totalorder %s70, %s84
      %p86 = scmp.eq.s32.totalorder %s25, 0
      %p87 = por %p85, %p86
      %s89 = sadd.s32 %s88, 1
      %p92 = scmp.eq.s32.totalorder %s19, 1
      %p93 = scmp.ne.s32.totalorder %s88, %s90
      %p94 = scmp.eq.s32.totalorder %s19, 0
      %p95 = por %p93, %p94
      %p96 = scmp.ne.s32.totalorder %s88, %s90
      %p97 = scmp.eq.s32.totalorder %s24, 1
      %p98 = por %p96, %p97
      %p99 = scmp.ne.s32.totalorder %s90, %s91
      %p100 = scmp.eq.s32.totalorder %s24, 0
      %p101 = por %p99, %p100
      %p102 = scmp.ne.s32.totalorder %s90, %s91
      %p103 = scmp.eq.s32.totalorder %s25, 1
      %p104 = por %p102, %p103
      %p106 = scmp.ne.s32.totalorder %s91, %s105
      %p107 = scmp.eq.s32.totalorder %s25, 0
      %p108 = por %p106, %p107
      %s110 = sadd.s32 %s109, 1
      %p113 = scmp.eq.s32.totalorder %s19, 1
      %p114 = scmp.ne.s32.totalorder %s109, %s111
      %p115 = scmp.eq.s32.totalorder %s19, 0
      %p116 = por %p114, %p115
      %p117 = scmp.ne.s32.totalorder %s109, %s111
      %p118 = scmp.eq.s32.totalorder %s24, 1
      %p119 = por %p117, %p118
      %p120 = scmp.ne.s32.totalorder %s111, %s112
      %p121 = scmp.eq.s32.totalorder %s24, 0
      %p122 = por %p120, %p121
      %p123 = scmp.ne.s32.totalorder %s111, %s112
      %p124 = scmp.eq.s32.totalorder %s25, 1
      %p125 = por %p123, %p124
      %p127 = scmp.ne.s32.totalorder %s112, %s126
      %p128 = scmp.eq.s32.totalorder %s25, 0
      %p129 = por %p127, %p128
      %s131 = sadd.s32 %s130, 1
      %p134 = scmp.eq.s32.totalorder %s19, 1
      %p135 = scmp.ne.s32.totalorder %s130, %s132
      %p136 = scmp.eq.s32.totalorder %s19, 0
      %p137 = por %p135, %p136
      %p138 = scmp.ne.s32.totalorder %s130, %s132
      %p139 = scmp.eq.s32.totalorder %s24, 1
      %p140 = por %p138, %p139
      %p141 = scmp.ne.s32.totalorder %s132, %s133
      %p142 = scmp.eq.s32.totalorder %s24, 0
      %p143 = por %p141, %p142
      %p144 = scmp.ne.s32.totalorder %s132, %s133
      %p145 = scmp.eq.s32.totalorder %s25, 1
      %p146 = por %p144, %p145
      %p148 = scmp.ne.s32.totalorder %s133, %s147
      %p149 = scmp.eq.s32.totalorder %s25, 0
      %p150 = por %p148, %p149
      %s151 = ssub.s32 %s26, %s38
      %s152 = ssub.s32 %s27, %s34
      %s153 = sor.u32 %s151, %s152
      %p154 = scmp.eq.s32.totalorder %s153, 0
      %s156 = sadd.s32 %s155, 1
      %s157 = scalar_select %p154, %s155, %s156
      %p160 = pneg %p154
      %p161 = scmp.eq.s32.totalorder %s19, 1
      %p162 = por %p160, %p161
      %p163 = scmp.ne.s32.totalorder %s155, %s158
      %p164 = scmp.eq.s32.totalorder %s19, 0
      %p165 = por %p163, %p164
      %p166 = scmp.ne.s32.totalorder %s155, %s158
      %p167 = scmp.eq.s32.totalorder %s24, 1
      %p168 = por %p166, %p167
      %p169 = scmp.ne.s32.totalorder %s158, %s159
      %p170 = scmp.eq.s32.totalorder %s24, 0
      %p171 = por %p169, %p170
      %p172 = scmp.ne.s32.totalorder %s158, %s159
      %p173 = scmp.eq.s32.totalorder %s25, 1
      %p174 = por %p172, %p173
      %p176 = scmp.ne.s32.totalorder %s159, %s175
      %p177 = scmp.eq.s32.totalorder %s25, 0
      %p178 = por %p176, %p177
      %s179 = ssub.s32 %s26, %s38
      %p180 = scmp.eq.s32.totalorder %s179, 0
      %s182 = sadd.s32 %s181, 1
      %s183 = scalar_select %p180, %s181, %s182
      %p186 = pneg %p180
      %p187 = scmp.eq.s32.totalorder %s19, 1
      %p188 = por %p186, %p187
      %p189 = scmp.ne.s32.totalorder %s181, %s184
      %p190 = scmp.eq.s32.totalorder %s19, 0
      %p191 = por %p189, %p190
      %p192 = scmp.ne.s32.totalorder %s181, %s184
      %p193 = scmp.eq.s32.totalorder %s24, 1
      %p194 = por %p192, %p193
      %p195 = scmp.ne.s32.totalorder %s184, %s185
      %p196 = scmp.eq.s32.totalorder %s24, 0
      %p197 = por %p195, %p196
      %p198 = scmp.ne.s32.totalorder %s184, %s185
      %p199 = scmp.eq.s32.totalorder %s25, 1
      %p200 = por %p198, %p199
      %p202 = scmp.ne.s32.totalorder %s185, %s201
      %p203 = scmp.eq.s32.totalorder %s25, 0
      %p204 = por %p202, %p203
      %p205 = scmp.le.s32.totalorder 1, %s19
      %p206 = scmp.lt.s32.totalorder %s19, 3
      %p207 = pnand %p205, %p206
      %p208 = pneg %p207
      // Predicated region
      $region9: #{tpu_custom_call.1} parent=5 // pred_check
        _
      $region10: #{tpu_custom_call.1} parent=5 // pred_check_branch
        %210 = sbr.rel (%p207) target = $region12
      $region11: #{tpu_custom_call.1} parent=5 // pred_region
        %s211 = ssub.s32 %s19, 1
        // Predicated region
        $region13: #{tpu_custom_call.1} parent=11 // pred_check
          %p212 = pneg %p80
        $region14: #{tpu_custom_call.1} parent=11 // pred_check_branch
          %214 = sbr.rel (%p212) target = $region16
        $region15: #{tpu_custom_call.1} parent=11 // pred_region
          _
        $region16: #{tpu_custom_call.1} parent=11 // pred_fallthru
          _
        // Predicated region
        $region17: #{tpu_custom_call.1} parent=11 // pred_check
          %p215 = pneg %p101
        $region18: #{tpu_custom_call.1} parent=11 // pred_check_branch
          %217 = sbr.rel (%p215) target = $region20
        $region19: #{tpu_custom_call.1} parent=11 // pred_region
          _
        $region20: #{tpu_custom_call.1} parent=11 // pred_fallthru
          _
        // Predicated region
        $region21: #{tpu_custom_call.1} parent=11 // pred_check
          %p218 = pneg %p122
        $region22: #{tpu_custom_call.1} parent=11 // pred_check_branch
          %220 = sbr.rel (%p218) target = $region24
        $region23: #{tpu_custom_call.1} parent=11 // pred_region
          _
        $region24: #{tpu_custom_call.1} parent=11 // pred_fallthru
          _
        // Predicated region
        $region25: #{tpu_custom_call.1} parent=11 // pred_check
          %p221 = pneg %p143
        $region26: #{tpu_custom_call.1} parent=11 // pred_check_branch
          %223 = sbr.rel (%p221) target = $region28
        $region27: #{tpu_custom_call.1} parent=11 // pred_region
          _
        $region28: #{tpu_custom_call.1} parent=11 // pred_fallthru
          _
      $region12: #{tpu_custom_call.1} parent=5 // pred_fallthru
        _
      %p224 = scmp.lt.s32.totalorder %s19, 2
      // Predicated region
      $region29: #{tpu_custom_call.1} parent=5 // pred_check
        %p225 = pneg %p224
      $region30: #{tpu_custom_call.1} parent=5 // pred_check_branch
        %227 = sbr.rel (%p225) target = $region32
      $region31: #{tpu_custom_call.1} parent=5 // pred_region
        // Predicated region
        $region33: #{tpu_custom_call.1} parent=31 // pred_check
          %p228 = pneg %p53
        $region34: #{tpu_custom_call.1} parent=31 // pred_check_branch
          %230 = sbr.rel (%p228) target = $region36
        $region35: #{tpu_custom_call.1} parent=31 // pred_region
          %p231 = scmp.lt.s32.totalorder %s26, 1
          %s232 = scalar_select %p231, %s26, 1
          %p233 = scmp.lt.s32.totalorder %s27, 0
          %s234 = scalar_select %p233, %s27, 0
          %s235 = sadd.s32 %s234, %s232
          %s236 = smul.addr %s235, 2
          %s237 = scalar_lea.vmem %s0, %s236
        $region36: #{tpu_custom_call.1} parent=31 // pred_fallthru
          _
      $region32: #{tpu_custom_call.1} parent=5 // pred_fallthru
        _
      %p238 = scmp.le.s32.totalorder 1, %s19
      %p239 = scmp.lt.s32.totalorder %s19, 3
      %p240 = pnand %p238, %p239
      %p241 = pneg %p240
      // Predicated region
      $region37: #{tpu_custom_call.1} parent=5 // pred_check
        _
      $region38: #{tpu_custom_call.1} parent=5 // pred_check_branch
        %243 = sbr.rel (%p240) target = $region40
      $region39: #{tpu_custom_call.1} parent=5 // pred_region
        %s244 = ssub.s32 %s19, 1
        %p245 = scmp.lt.s32.totalorder %s28, 1
        %s246 = scalar_select %p245, %s28, 1
        %p247 = scmp.lt.s32.totalorder %s29, 0
        %s248 = scalar_select %p247, %s29, 0
        %s249 = sadd.s32 %s248, %s246
        %s250 = smul.addr %s249, 2
        %s251 = scalar_lea.vmem %s0, %s250
        %p252 = pneg %p59
        %p253 = pneg %p56
        %p254 = pneg %p80
        %p255 = pneg %p77
        %p256 = pneg %p101
        %p257 = pneg %p98
        %p258 = pneg %p122
        %p259 = pneg %p119
        %p260 = pneg %p143
        %p261 = pneg %p140
        %p262 = pneg %p171
        %p263 = pneg %p168
        %s264 = sand.u32 %s158, 1
        %s265 = scalar_lea.sflag [#allocation4], %s264
        %s266 = sand.u32 %s158, 1
        %s267 = smul.addr %s266, 2
        %s268 = scalar_lea.vmem [#allocation3], %s267
        %p269 = pneg %p197
        %p270 = pneg %p194
        %s271 = sand.u32 %s184, 1
        %s272 = scalar_lea.sflag [#allocation6], %s271
        %s273 = sand.u32 %s184, 1
        %s274 = scalar_lea.vmem [#allocation5], %s273
        %p275 = scmp.lt.s32.totalorder %s28, 1
        %s276 = scalar_select %p275, %s28, 1
        %p277 = scmp.lt.s32.totalorder %s29, 0
        %s278 = scalar_select %p277, %s29, 0
        %s279 = sadd.s32 %s278, %s276
        %s280 = smul.addr %s279, 2
        %s281 = scalar_lea.vmem %s0, %s280
        %v282 = vld [vmem:[%s281] sm:$0x3]
        %v283 = vmax.f32 %v282, 0.0
        %284 = vst [vmem:[%s268] sm:$0x3] %v283
        %p285 = scmp.eq.s32.totalorder %s29, 0
        // Predicated region
        $region41: #{tpu_custom_call.1} parent=39 // pred_check
          %p286 = pneg %p285
        $region42: #{tpu_custom_call.1} parent=39 // pred_check_branch
          %288 = sbr.rel (%p286) target = $region44
        $region43: #{tpu_custom_call.1} parent=39 // pred_region
          %289 = vst [vmem:[#allocation2] sm:$0x1] 0.0
        $region44: #{tpu_custom_call.1} parent=39 // pred_fallthru
          _
        %v290 = vld [vmem:[#allocation2] sm:$0x1]
        %vm291 = vcmask 1041408
        %v292 = vsel %vm291, %v282, 0.0
        %v293 = vrot.slane %v292, 4
        %v294 = vadd.f32 %v292, %v293
        %v295 = vrot.slane %v294, 2
        %v296 = vadd.f32 %v294, %v295
        %v297 = vrot.slane %v296, 1
        %v298 = vadd.f32 %v296, %v297
        %v299 = vadd.f32 %v290, %v298
        %300 = vst [vmem:[#allocation2] sm:$0x1] %v299
        // Predicated region
        $region45: #{tpu_custom_call.1} parent=39 // pred_check
          %p301 = pneg %p285
        $region46: #{tpu_custom_call.1} parent=39 // pred_check_branch
          %303 = sbr.rel (%p301) target = $region48
        $region47: #{tpu_custom_call.1} parent=39 // pred_region
          %v304 = vld [vmem:[#allocation2] sm:$0x1]
          %v305 = vld [vmem:[%s1] sm:$0xff]
          %v306 = vld [vmem:[%s1 + $0x8] sm:$0xff]
          %v307 = vld [vmem:[%s1 + $0x10] sm:$0xff]
          %v308 = vld [vmem:[%s1 + $0x18] sm:$0xff]
          %v309 = vld [vmem:[%s1 + $0x20] sm:$0xff]
          %v310 = vld [vmem:[%s1 + $0x28] sm:$0xff]
          %v311 = vld [vmem:[%s1 + $0x30] sm:$0xff]
          %v312 = vld [vmem:[%s1 + $0x38] sm:$0xff]
          %v313 = vld [vmem:[%s1 + $0x40] sm:$0xff]
          %v314 = vld [vmem:[%s1 + $0x48] sm:$0xff]
          %v315 = vld [vmem:[%s1 + $0x50] sm:$0xff]
          %v316 = vld [vmem:[%s1 + $0x58] sm:$0xff]
          %v317 = vld [vmem:[%s1 + $0x60] sm:$0xff]
          %v318 = vld [vmem:[%s1 + $0x68] sm:$0xff]
          %v319 = vld [vmem:[%s1 + $0x70] sm:$0xff]
          %v320 = vld [vmem:[%s1 + $0x78] sm:$0xff]
          %v321 = vld [vmem:[%s2] sm:$0x1]
          %322 = vmatprep.subr.mxu0 0.0
          %323 = vmatpush1.msra.mxu0 %v305
          %324 = vmatprep.subr.mxu0 0.0
          %325 = vmatpush1.msra.mxu0 %v306
          %326 = vmatprep.subr.mxu0 0.0
          %327 = vmatpush1.msra.mxu0 %v307
          %328 = vmatprep.subr.mxu0 0.0
          %329 = vmatpush1.msra.mxu0 %v308
          %330 = vmatprep.subr.mxu0 0.0
          %331 = vmatpush1.msra.mxu0 %v309
          %332 = vmatprep.subr.mxu0 0.0
          %333 = vmatpush1.msra.mxu0 %v310
          %334 = vmatprep.subr.mxu0 0.0
          %335 = vmatpush1.msra.mxu0 %v311
          %336 = vmatprep.subr.mxu0 0.0
          %337 = vmatpush1.msra.mxu0 %v312
          %338 = vmatprep.subr.mxu0 0.0
          %339 = vmatpush1.msra.mxu0 %v313
          %340 = vmatprep.subr.mxu0 0.0
          %341 = vmatpush1.msra.mxu0 %v314
          %342 = vmatprep.subr.mxu0 0.0
          %343 = vmatpush1.msra.mxu0 %v315
          %344 = vmatprep.subr.mxu0 0.0
          %345 = vmatpush1.msra.mxu0 %v316
          %346 = vmatprep.subr.mxu0 0.0
          %347 = vmatpush1.msra.mxu0 %v317
          %348 = vmatprep.subr.mxu0 0.0
          %349 = vmatpush1.msra.mxu0 %v318
          %350 = vmatprep.subr.mxu0 0.0
          %351 = vmatpush1.msra.mxu0 %v319
          %352 = vmatprep.subr.mxu0 0.0
          %353 = vmatpush1.msra.mxu0 %v320
          %354 = vmatprep.subr.mxu0 0.0
          %355 = vmatpush1.msra.mxu0 0.0
          %356 = vmatprep.subr.mxu0 0.0
          %357 = vmatpush1.msra.mxu0 0.0
          %358 = vmatprep.subr.mxu0 0.0
          %359 = vmatpush1.msra.mxu0 0.0
          %360 = vmatprep.subr.mxu0 0.0
          %361 = vmatpush1.msra.mxu0 0.0
          %362 = vmatprep.subr.mxu0 0.0
          %363 = vmatpush1.msra.mxu0 0.0
          %364 = vmatprep.subr.mxu0 0.0
          %365 = vmatpush1.msra.mxu0 0.0
          %366 = vmatprep.subr.mxu0 0.0
          %367 = vmatpush1.msra.mxu0 0.0
          %368 = vmatprep.subr.mxu0 0.0
          %369 = vmatpush1.msra.mxu0 0.0
          %370 = vmatprep.subr.mxu0 0.0
          %371 = vmatpush1.msra.mxu0 0.0
          %372 = vmatprep.subr.mxu0 0.0
          %373 = vmatpush1.msra.mxu0 0.0
          %374 = vmatprep.subr.mxu0 0.0
          %375 = vmatpush1.msra.mxu0 0.0
          %376 = vmatprep.subr.mxu0 0.0
          %377 = vmatpush1.msra.mxu0 0.0
          %378 = vmatprep.subr.mxu0 0.0
          %379 = vmatpush1.msra.mxu0 0.0
          %380 = vmatprep.subr.mxu0 0.0
          %381 = vmatpush1.msra.mxu0 0.0
          %382 = vmatprep.subr.mxu0 0.0
          %383 = vmatpush1.msra.mxu0 0.0
          %384 = vmatprep.subr.mxu0 0.0
          %385 = vmatpush1.msra.mxu0 0.0
          %386 = vmatprep.mubr.f32.mxu0 0.0
          %387 = vmatmul.mubr.f32.gmra.mrb[0].mxu0 %v304
          %v388 = vpop.f32.mrb[0].mxu0
          %v389 = vadd.f32 %v321, %v388
          %v390 = vpop.f32.mrb[0].mxu0
          %391 = vdwg.mxu0
          %v392 = vmax.f32 %v389, 0.0
          %v393 = vld [vmem:[%s3] sm:$0xff]
          %v394 = vld [vmem:[%s3 + $0x8] sm:$0xff]
          %v395 = vld [vmem:[%s4] sm:$0x1]
          %vm396 = vcmask 130048
          %v398 = vsel %vm396, %v392, 0
          %400 = vmatprep.subr.mxu0 0.0
          %401 = vmatpush1.msra.mxu0 %v393
          %402 = vmatprep.subr.mxu0 0.0
          %403 = vmatpush1.msra.mxu0 %v394
          %404 = vmatprep.subr.mxu0 0.0
          %405 = vmatpush1.msra.mxu0 0.0
          %406 = vmatprep.subr.mxu0 0.0
          %407 = vmatpush1.msra.mxu0 0.0
          %408 = vmatprep.subr.mxu0 0.0
          %409 = vmatpush1.msra.mxu0 0.0
          %410 = vmatprep.subr.mxu0 0.0
          %411 = vmatpush1.msra.mxu0 0.0
          %412 = vmatprep.subr.mxu0 0.0
          %413 = vmatpush1.msra.mxu0 0.0
          %414 = vmatprep.subr.mxu0 0.0
          %415 = vmatpush1.msra.mxu0 0.0
          %416 = vmatprep.subr.mxu0 0.0
          %417 = vmatpush1.msra.mxu0 0.0
          %418 = vmatprep.subr.mxu0 0.0
          %419 = vmatpush1.msra.mxu0 0.0
          %420 = vmatprep.subr.mxu0 0.0
          %421 = vmatpush1.msra.mxu0 0.0
          %422 = vmatprep.subr.mxu0 0.0
          %423 = vmatpush1.msra.mxu0 0.0
          %424 = vmatprep.subr.mxu0 0.0
          %425 = vmatpush1.msra.mxu0 0.0
          %426 = vmatprep.subr.mxu0 0.0
          %427 = vmatpush1.msra.mxu0 0.0
          %428 = vmatprep.subr.mxu0 0.0
          %429 = vmatpush1.msra.mxu0 0.0
          %430 = vmatprep.subr.mxu0 0.0
          %431 = vmatpush1.msra.mxu0 0.0
          %432 = vmatprep.subr.mxu0 0.0
          %433 = vmatpush1.msra.mxu0 0.0
          %434 = vmatprep.subr.mxu0 0.0
          %435 = vmatpush1.msra.mxu0 0.0
          %436 = vmatprep.subr.mxu0 0.0
          %437 = vmatpush1.msra.mxu0 0.0
          %438 = vmatprep.subr.mxu0 0.0
          %439 = vmatpush1.msra.mxu0 0.0
          %440 = vmatprep.subr.mxu0 0.0
          %441 = vmatpush1.msra.mxu0 0.0
          %442 = vmatprep.subr.mxu0 0.0
          %443 = vmatpush1.msra.mxu0 0.0
          %444 = vmatprep.subr.mxu0 0.0
          %445 = vmatpush1.msra.mxu0 0.0
          %446 = vmatprep.subr.mxu0 0.0
          %447 = vmatpush1.msra.mxu0 0.0
          %448 = vmatprep.subr.mxu0 0.0
          %449 = vmatpush1.msra.mxu0 0.0
          %450 = vmatprep.subr.mxu0 0.0
          %451 = vmatpush1.msra.mxu0 0.0
          %452 = vmatprep.subr.mxu0 0.0
          %453 = vmatpush1.msra.mxu0 0.0
          %454 = vmatprep.subr.mxu0 0.0
          %455 = vmatpush1.msra.mxu0 0.0
          %456 = vmatprep.subr.mxu0 0.0
          %457 = vmatpush1.msra.mxu0 0.0
          %458 = vmatprep.subr.mxu0 0.0
          %459 = vmatpush1.msra.mxu0 0.0
          %460 = vmatprep.subr.mxu0 0.0
          %461 = vmatpush1.msra.mxu0 0.0
          %462 = vmatprep.subr.mxu0 0.0
          %463 = vmatpush1.msra.mxu0 0.0
          %464 = vmatprep.mubr.f32.mxu0 0.0
          %465 = vmatmul.mubr.f32.gmra.mrb[0].mxu0 %v398
          %v466 = vpop.f32.mrb[0].mxu0
          %v467 = vadd.f32 %v395, %v466
          %v468 = vpop.f32.mrb[0].mxu0
          %469 = vdwg.mxu0
          %v470 = vmul.f32 %v467, 0.5
          %v471 = vtanh.pop %v470
          %v472 = vadd.f32 %v471, 1.0
          %v473 = vmul.f32 %v472, 0.5
          %vm474 = vcmask 24576
          %475 = vst.msk [vmem:[%s274] sm:$0x1] %vm474, %v473
        $region48: #{tpu_custom_call.1} parent=39 // pred_fallthru
          _
        %s476 = sand.u32 %s158, 1
        %s477 = scalar_lea.sflag [#allocation4], %s476
        %s478 = sand.u32 %s158, 1
        %s479 = smul.addr %s478, 2
        %s480 = scalar_lea.vmem [#allocation3], %s479
        %s481 = sand.u32 %s184, 1
        %s482 = scalar_lea.sflag [#allocation6], %s481
        %s483 = sand.u32 %s184, 1
        %s484 = scalar_lea.vmem [#allocation5], %s483
        // Predicated region
        $region49: #{tpu_custom_call.1} parent=39 // pred_check
          %p485 = pneg %p168
        $region50: #{tpu_custom_call.1} parent=39 // pred_check_branch
          %487 = sbr.rel (%p485) target = $region52
        $region51: #{tpu_custom_call.1} parent=39 // pred_region
          %s489 = ssub.s32 32, 32
          %490 = vsyncadd %s477, %s489
          %s491 = sadd.s32 %s29, %s28
          %s492 = smul.addr %s491, 32
          %s493 = scalar_lea.hbm %s5, %s492
          %s495 = sshll.u32 %s480, 4
          %s496 = int_to_ptr.vmem [resolvable:$true] %s495
          %498 = dma.vmem_to_hbm [thread:$0]  %s496, 32, %s493, %s477
        $region52: #{tpu_custom_call.1} parent=39 // pred_fallthru
          _
        // Predicated region
        $region53: #{tpu_custom_call.1} parent=39 // pred_check
          %p499 = pneg %p194
        $region54: #{tpu_custom_call.1} parent=39 // pred_check_branch
          %501 = sbr.rel (%p499) target = $region56
        $region55: #{tpu_custom_call.1} parent=39 // pred_region
          %s503 = ssub.s32 16, 16
          %504 = vsyncadd %s482, %s503
          %s505 = smul.addr %s28, 16
          %s506 = scalar_lea.hbm %s6, %s505
          %s508 = sshll.u32 %s484, 4
          %s509 = int_to_ptr.vmem [resolvable:$true] %s508
          %511 = dma.vmem_to_hbm [thread:$0]  %s509, 16, %s506, %s482
        $region56: #{tpu_custom_call.1} parent=39 // pred_fallthru
          _
      $region40: #{tpu_custom_call.1} parent=5 // pred_fallthru
        _
      %p512 = scmp.le.s32.totalorder 2, %s19
      // Predicated region
      $region57: #{tpu_custom_call.1} parent=5 // pred_check
        %p513 = pneg %p512
      $region58: #{tpu_custom_call.1} parent=5 // pred_check_branch
        %515 = sbr.rel (%p513) target = $region60
      $region59: #{tpu_custom_call.1} parent=5 // pred_region
        %s516 = ssub.s32 %s19, 2
        // Predicated region
        $region61: #{tpu_custom_call.1} parent=59 // pred_check
          %p517 = pneg %p174
        $region62: #{tpu_custom_call.1} parent=59 // pred_check_branch
          %519 = sbr.rel (%p517) target = $region64
        $region63: #{tpu_custom_call.1} parent=59 // pred_region
          %s520 = sand.u32 %s159, 1
          %s521 = scalar_lea.sflag [#allocation4], %s520
          %s522 = sand.u32 %s159, 1
          %s523 = smul.addr %s522, 2
          %s524 = scalar_lea.vmem [#allocation3], %s523
          %525 = dma.done %s521, 32
        $region64: #{tpu_custom_call.1} parent=59 // pred_fallthru
          _
        // Predicated region
        $region65: #{tpu_custom_call.1} parent=59 // pred_check
          %p526 = pneg %p200
        $region66: #{tpu_custom_call.1} parent=59 // pred_check_branch
          %528 = sbr.rel (%p526) target = $region68
        $region67: #{tpu_custom_call.1} parent=59 // pred_region
          %s529 = sand.u32 %s185, 1
          %s530 = scalar_lea.sflag [#allocation6], %s529
          %s531 = sand.u32 %s185, 1
          %s532 = scalar_lea.vmem [#allocation5], %s531
          %533 = dma.done %s530, 16
        $region68: #{tpu_custom_call.1} parent=59 // pred_fallthru
          _
      $region60: #{tpu_custom_call.1} parent=5 // pred_fallthru
        _
    $region6: #{tpu_custom_call.1} parent=1 // loop_footer
      %s23 = sadd.s32 1, %s19
    $region7: #{tpu_custom_call.1} parent=1 // loop_footer_branch
      %18 = sbr.rel target = $region3
    $region8: #{tpu_custom_call.1} parent=1 // loop_exit
      _
    %534 = vsyncpa [#allocation4], 1
    %s535 = scalar_lea.sflag [#allocation4], 1
    %536 = vsyncpa %s535, 1
    %537 = vsyncpa [#allocation6], 1
    %s538 = scalar_lea.sflag [#allocation6], 1
    %539 = vsyncpa %s538, 1

</llo_original>
